<compile_context>
chip_gen: v6e
topology: v6e:2x2x1
jax: 0.10.0
libtpu: 0.0.40
codegen_flags: <defaults>
</compile_context>

<pallas_src>
import functools
import numpy as np
import jax
import jax.numpy as jnp
from jax.experimental import pallas as pl
from jax.experimental.pallas import tpu as pltpu

_PI = float(np.pi)
_TAN_PI_8 = 0.41421356237309503


def _atan2(y, x):
    """Vectorized atan2 from basic VPU ops; divides go to the EUP.

    Cephes-style arctan on [0,1] with one range reduction; abs error ~1e-6 rad
    vs torch.atan2.
    # TODO(synk): switch to jnp.arctan2 once a Mosaic vector atan2 lowering is
    # guaranteed; hand-rolled here so the fused kernel always compiles.
    """
    ax = jnp.abs(x)
    ay = jnp.abs(y)
    amax = jnp.maximum(ax, ay)
    amin = jnp.minimum(ax, ay)
    a = amin * pl.reciprocal(jnp.maximum(amax, 1e-30))   # a in [0,1]; atan2(0,0)->0
    red = a > _TAN_PI_8
    t = jnp.where(red, (a - 1.0) * pl.reciprocal(a + 1.0), a)
    z = t * t
    p = (((8.05374449538e-2 * z - 1.38776856032e-1) * z
          + 1.99777106478e-1) * z - 3.33329491539e-1) * z * t + t
    r = jnp.where(red, p + _PI / 4.0, p)
    r = jnp.where(ay > ax, _PI / 2.0 - r, r)     # undo min/max swap
    r = jnp.where(x < 0.0, _PI - r, r)           # quadrant fixups
    return jnp.where(y < 0.0, -r, r)


# ----------------------------------------------------------------------------
# Fused Pallas kernel: cls_head + reg_head (one matmul) + box decode epilogue
# ----------------------------------------------------------------------------
def _heads_decode_kernel(x_ref, w_ref, b_ref, pos_ref, scale_ref,
                         cls_ref, bbox_ref, dec_ref, *, A):
    # x_ref:     (1, C, TH)  feature tile, channel-first (HW on lanes)
    # w_ref:     (11A, C)    rows: [reg class-major (8A) | cls (A) |
    #                               sin-plane (A) | cos-plane (A)]
    # b_ref:     (11A, 1)    matching bias rows (f32)
    # pos_ref:   (8, TH)     [col_scaled, row_scaled, lr2, 0,0,0,0,0]
    # scale_ref: (8, 1)      [s0, s1, s2, s0, s1, s2, 1, 1]
    # cls_ref:   (1, A, TH); bbox_ref: (1, 8A, TH); dec_ref: (1, A, 8, TH)
    R = 8 * A
    out = jnp.dot(w_ref[...], x_ref[0],
                  preferred_element_type=jnp.float32) + b_ref[...]

    bbox_ref[0] = out[:R].astype(bbox_ref.dtype)        # aligned lane-dense NCHW reg
    cls_ref[0] = out[R:R + A].astype(cls_ref.dtype)     # lane-dense NCHW cls

    # One batched atan2 over the packed (A, TH) sin / cos planes.
    rot = _atan2(out[R + A:R + 2 * A], out[R + 2 * A:R + 3 * A])

    pos = pos_ref[...]                                  # (8, TH)
    scale = scale_ref[...]                              # (8, 1)
    row6 = jax.lax.broadcasted_iota(jnp.int32, (8, 1), 0) == 6
    for i in range(A):                                  # A small & static -> unrolled
        # Whole affine decode for class i: single FMA on a full (8, TH) block.
        dec8 = out[i * 8:(i + 1) * 8] * scale + pos
        dec8 = jnp.where(row6, rot[i:i + 1], dec8)      # rot -> row 6; row 7 is pad
        dec_ref[0, i] = dec8                            # one aligned 8-row store


def _pick_lane_tile(C, A, in_itemsize, out_itemsize):
    """Budget-derived lane-tile width + explicit scoped-VMEM limit."""
    try:
        phys = int(getattr(pltpu.get_tpu_info(), "vmem_capacity_bytes",
                           128 * 1024 * 1024))
    except Exception:                       # non-TPU tracing fallback
        phys = 128 * 1024 * 1024
    vmem_limit = min(phys // 2, 64 * 1024 * 1024)   # v5e/v6e: 64 MiB, v7x: 32 MiB
    # Bytes per lane column: double-buffered x/pos inputs, double-buffered
    # cls/bbox/dec outputs, plus the VMEM-resident f32 matmul result & temps.
    per_lane = (2 * (C * in_itemsize + 8 * 4)
                + 2 * (9 * A * out_itemsize + 8 * A * 4)
                + (11 * A + 8 * A) * 4)
    th = ((vmem_limit // 2) // per_lane // 128) * 128
    # NOTE: if a bundle dump shows spill traffic from the (11A, th) f32 result,
    # halve th rather than restructuring the matmul.
    return int(max(128, min(th, 8192))), vmem_limit


def conv_heads_and_decode(feat_nchw, params, cfg):
    """Fused cls/reg 1x1-conv heads + multi-class CenterPoint box decode.

    feat_nchw: (N, C, H, W)
    returns cls (N, A, H, W), bbox (N, 8A, H, W), dec (N, A, H*W, 7)
    """
    N, C, H, W = feat_nchw.shape
    A = int(cfg['anchor_number'])
    R = 8 * A
    osf = float(cfg['out_size_factor'])
    vs = tuple(float(v) for v in cfg['voxel_size'])
    lr = tuple(float(v) for v in cfg['lidar_range'])
    HW = H * W
    out_dtype = feat_nchw.dtype

    th, vmem_limit = _pick_lane_tile(C, A,
                                     jnp.dtype(feat_nchw.dtype).itemsize,
                                     jnp.dtype(out_dtype).itemsize)
    th = min(th, ((HW + 127) // 128) * 128)
    hw_pad = pl.cdiv(HW, th) * th
    n_tiles = hw_pad // th
    # Keep both TensorCores of a dual-TC chip (v7x) busy when the batch is 1.
    if N * n_tiles < 2 and th > 128:
        th = max(128, (th // 2 // 128) * 128)
        hw_pad = pl.cdiv(HW, th) * th
        n_tiles = hw_pad // th

    # Channel-first: NCHW -> (N, C, HW) is a free reshape (no HBM transpose).
    x = feat_nchw.reshape(N, C, HW)
    if hw_pad != HW:
        x = jnp.pad(x, ((0, 0), (0, 0), (0, hw_pad - HW)))

    # Fused head weights: class-major reg rows (bbox output order), cls rows,
    # then duplicated sin/cos rows gathered plane-major so the kernel gets
    # packed (A, TH) sin/cos blocks for one batched atan2 (2A extra matmul
    # rows instead of an in-kernel sublane gather).
    sin_rows = np.arange(A) * 8 + 6
    cos_rows = np.arange(A) * 8 + 7
    reg_w, reg_b = params['reg_w'], params['reg_b']
    w_all = jnp.concatenate([reg_w, params['cls_w'],
                             reg_w[sin_rows], reg_w[cos_rows]], axis=0)
    w_all = w_all.astype(feat_nchw.dtype)   # bf16 features -> bf16 MXU operands
    b_all = jnp.concatenate([reg_b, params['cls_b'],
                             reg_b[sin_rows], reg_b[cos_rows]]
                            ).astype(jnp.float32).reshape(11 * A, 1)

    # Pre-scaled positional addend rows (and constant lr2) so the affine decode
    # is a single FMA per class; rows 3..7 are zero.
    pix = jnp.arange(hw_pad, dtype=jnp.int32)
    col_s = (pix % W).astype(jnp.float32) * (osf * vs[0]) + lr[0]
    row_s = (pix // W).astype(jnp.float32) * (osf * vs[1]) + lr[1]
    pos = jnp.zeros((8, hw_pad), jnp.float32)
    pos = pos.at[0].set(col_s).at[1].set(row_s).at[2].set(lr[2])

    scale = jnp.array([osf * vs[0], osf * vs[1], osf * vs[2],
                       osf * vs[0], osf * vs[1], osf * vs[2], 1.0, 1.0],
                      dtype=jnp.float32).reshape(8, 1)

    kern = functools.partial(_heads_decode_kernel, A=A)
    cls_p, bbox_p, dec_p = pl.pallas_call(
        kern,
        out_shape=(jax.ShapeDtypeStruct((N, A, hw_pad), out_dtype),
                   jax.ShapeDtypeStruct((N, R, hw_pad), out_dtype),
                   jax.ShapeDtypeStruct((N, A, 8, hw_pad), jnp.float32)),
        grid_spec=pltpu.PrefetchScalarGridSpec(
            num_scalar_prefetch=0,
            grid=(N, n_tiles),
            in_specs=[
                pl.BlockSpec((1, C, th), lambda n, j: (n, 0, j)),
                pl.BlockSpec((11 * A, C), lambda n, j: (0, 0)),
                pl.BlockSpec((11 * A, 1), lambda n, j: (0, 0)),
                pl.BlockSpec((8, th), lambda n, j: (0, j)),
                pl.BlockSpec((8, 1), lambda n, j: (0, 0)),
            ],
            out_specs=[
                pl.BlockSpec((1, A, th), lambda n, j: (n, 0, j)),
                pl.BlockSpec((1, R, th), lambda n, j: (n, 0, j)),
                pl.BlockSpec((1, A, 8, th), lambda n, j: (n, 0, 0, j)),
            ],
        ),
        compiler_params=pltpu.CompilerParams(
            dimension_semantics=("parallel", "parallel"),
            vmem_limit_bytes=vmem_limit,
        ),
    )(x, w_all, b_all, pos, scale)

    cls = cls_p[:, :, :HW].reshape(N, A, H, W)             # free reshapes: NCHW
    bbox = bbox_p[:, :, :HW].reshape(N, R, H, W)
    dec = dec_p[:, :, :7, :HW]                              # drop per-class pad row
    # Layout plumbing only: the module's output format wants code_size last.
    # TODO(synk): drop this transpose if downstream can consume (N, A, 7, HW).
    reg_preds_multiclass = jnp.transpose(dec, (0, 1, 3, 2))  # (N, A, HW, 7)
    return cls, bbox, reg_preds_multiclass


# ----------------------------------------------------------------------------
# Forward pass (glue in plain JAX; hot path is the single fused kernel above)
# ----------------------------------------------------------------------------
def center_point_forward(spatial_features_2d, record_len, params, cfg):
    cls, bbox, reg_preds_multiclass = conv_heads_and_decode(
        spatial_features_2d, params, cfg)

    # psm_single / rm_single are the same heads on the same features
    # (fused_feature == spatial_features_2d in this module, training mode).
    psm_single, rm_single = cls, bbox

    # generate_predicted_boxes(cls, bbox) reads only reg channels 0..7
    # (== class 0), so the "full" and "_single" decodes equal multiclass[:, 0].
    bbox_temp = reg_preds_multiclass[:, 0]
    bbox_temp_single = bbox_temp

    # regroup: keep the ego (first) cav of every sample in the batch
    starts = np.concatenate(
        [[0], np.cumsum(np.asarray(record_len))[:-1]]).astype(np.int32)
    feature_egos = spatial_features_2d[jnp.asarray(starts)]

    return {
        'cls_preds': cls,
        'reg_preds': bbox_temp,
        'reg_preds_multiclass': reg_preds_multiclass,
        'bbox_preds': bbox,
        'fused_feature': feature_egos,
        'cls_preds_single': psm_single,
        'reg_preds_single': bbox_temp_single,
        'bbox_preds_single': rm_single,
    }


# ----------------------------------------------------------------------------
# Deterministic parameter init (mirrors init_weight in the PyTorch module)
# ----------------------------------------------------------------------------
def init_params(key, C, A):
    pi = 0.01
    k1, k2, k3 = jax.random.split(key, 3)
    bound = 1.0 / np.sqrt(C)                          # conv1x1 fan_in = C
    cls_w = jax.random.uniform(k1, (A, C), jnp.float32, -bound, bound)
    cls_b = jnp.full((A,), -np.log((1.0 - pi) / pi), jnp.float32)
    reg_w = 0.001 * jax.random.normal(k2, (8 * A, C), jnp.float32)
    reg_b = jax.random.uniform(k3, (8 * A,), jnp.float32, -bound, bound)
    return dict(cls_w=cls_w, cls_b=cls_b, reg_w=reg_w, reg_b=reg_b)


if __name__ == "__main__":
    key = jax.random.PRNGKey(0)
    kf, kp = jax.random.split(key)

    record_len = [2, 1]                 # 2 samples, sum = 3 cav feature maps
    N, C, H, W = int(sum(record_len)), 64, 16, 16
    A = 3                               # anchor_number (= num classes)
    cfg = dict(anchor_number=A,
               out_size_factor=4,
               voxel_size=[0.4, 0.4, 4.0],
               lidar_range=[-140.8, -40.0, -3.0, 140.8, 40.0, 1.0])

    spatial_features_2d = jax.random.normal(kf, (N, C, H, W), jnp.float32)
    params = init_params(kp, C, A)

    out = center_point_forward(spatial_features_2d, record_len, params, cfg)
    out = jax.block_until_ready(out)

    assert out['cls_preds'].shape == (N, A, H, W)
    assert out['bbox_preds'].shape == (N, 8 * A, H, W)
    assert out['reg_preds'].shape == (N, H * W, 7)
    assert out['reg_preds_multiclass'].shape == (N, A, H * W, 7)
    assert out['fused_feature'].shape == (len(record_len), C, H, W)
    assert out['cls_preds_single'].shape == (N, A, H, W)
    assert out['reg_preds_single'].shape == (N, H * W, 7)
    assert out['bbox_preds_single'].shape == (N, 8 * A, H, W)
    assert bool(jnp.all(jnp.isfinite(out['reg_preds_multiclass'])))
    assert bool(jnp.all(jnp.isfinite(out['cls_preds'])))
    print("KERNEL_OK")
</pallas_src>

<mosaic_0001>
module attributes {stable_mosaic.version = 11 : i64} {
  func.func @_heads_decode_kernel(%arg0: i32, %arg1: i32, %arg2: memref<1x64x256xf32, #tpu.memory_space<vmem>>, %arg3: memref<33x64xf32, #tpu.memory_space<vmem>>, %arg4: memref<33x1xf32, #tpu.memory_space<vmem>>, %arg5: memref<8x256xf32, #tpu.memory_space<vmem>>, %arg6: memref<8x1xf32, #tpu.memory_space<vmem>>, %arg7: memref<1x3x256xf32, #tpu.memory_space<vmem>>, %arg8: memref<1x24x256xf32, #tpu.memory_space<vmem>>, %arg9: memref<1x3x8x256xf32, #tpu.memory_space<vmem>>) attributes {dimension_semantics = [#tpu.dimension_semantics<parallel>, #tpu.dimension_semantics<parallel>], iteration_bounds = array<i64: 3, 1>, scalar_prefetch = 0 : i64, scratch_operands = 0 : i64, tpu.core_type = #tpu.core_type<tc>, window_params = [{transform_indices = @transform_0, window_bounds = array<i64: 1, 64, 256>}, {pipeline_mode = #tpu.pipeline_mode<synchronous>, transform_indices = @transform_1, window_bounds = array<i64: 33, 64>}, {pipeline_mode = #tpu.pipeline_mode<synchronous>, transform_indices = @transform_2, window_bounds = array<i64: 33, 1>}, {transform_indices = @transform_3, window_bounds = array<i64: 8, 256>}, {pipeline_mode = #tpu.pipeline_mode<synchronous>, transform_indices = @transform_4, window_bounds = array<i64: 8, 1>}, {transform_indices = @transform_5, window_bounds = array<i64: 1, 3, 256>}, {transform_indices = @transform_6, window_bounds = array<i64: 1, 24, 256>}, {transform_indices = @transform_7, window_bounds = array<i64: 1, 3, 8, 256>}]} {
    %c0 = arith.constant 0 : index
    %c0_0 = arith.constant 0 : index
    %0 = vector.load %arg3[%c0, %c0_0] : memref<33x64xf32, #tpu.memory_space<vmem>>, vector<33x64xf32>
    %c0_1 = arith.constant 0 : index
    %c0_2 = arith.constant 0 : index
    %c0_3 = arith.constant 0 : index
    %1 = vector.load %arg2[%c0_1, %c0_2, %c0_3] : memref<1x64x256xf32, #tpu.memory_space<vmem>>, vector<1x64x256xf32>
    %2 = vector.shape_cast %1 : vector<1x64x256xf32> to vector<64x256xf32>
    %cst = arith.constant dense<0.000000e+00> : vector<33x256xf32>
    %3 = tpu.matmul %0, %2, %cst {dimension_numbers = #tpu.dot_dimension_numbers<[1], [0], [0], [1], [0, 0, 1, 1], [], []>} : vector<33x64xf32>, vector<64x256xf32>, vector<33x256xf32> -> vector<33x256xf32>
    %c0_4 = arith.constant 0 : index
    %c0_5 = arith.constant 0 : index
    %4 = vector.load %arg4[%c0_4, %c0_5] : memref<33x1xf32, #tpu.memory_space<vmem>>, vector<33x1xf32>
    %5 = vector.broadcast %4 : vector<33x1xf32> to vector<33x256xf32>
    %6 = arith.addf %3, %5 : vector<33x256xf32>
    %7 = vector.extract_strided_slice %6 {offsets = [0, 0], sizes = [24, 256], strides = [1, 1]} : vector<33x256xf32> to vector<24x256xf32>
    %c0_6 = arith.constant 0 : index
    %c0_7 = arith.constant 0 : index
    %c0_8 = arith.constant 0 : index
    %8 = vector.load %arg8[%c0_6, %c0_7, %c0_8] : memref<1x24x256xf32, #tpu.memory_space<vmem>>, vector<1x24x256xf32>
    %9 = vector.shape_cast %8 : vector<1x24x256xf32> to vector<24x256xf32>
    %10 = vector.shape_cast %7 : vector<24x256xf32> to vector<1x24x256xf32>
    tpu.vector_store %arg8[%c0_6, %c0_7, %c0_8], %10 {strides = array<i32>} : memref<1x24x256xf32, #tpu.memory_space<vmem>>, vector<1x24x256xf32>,
    %11 = vector.extract_strided_slice %6 {offsets = [24, 0], sizes = [3, 256], strides = [1, 1]} : vector<33x256xf32> to vector<3x256xf32>
    %c0_9 = arith.constant 0 : index
    %c0_10 = arith.constant 0 : index
    %c0_11 = arith.constant 0 : index
    %12 = vector.load %arg7[%c0_9, %c0_10, %c0_11] : memref<1x3x256xf32, #tpu.memory_space<vmem>>, vector<1x3x256xf32>
    %13 = vector.shape_cast %12 : vector<1x3x256xf32> to vector<3x256xf32>
    %14 = vector.shape_cast %11 : vector<3x256xf32> to vector<1x3x256xf32>
    tpu.vector_store %arg7[%c0_9, %c0_10, %c0_11], %14 {strides = array<i32>} : memref<1x3x256xf32, #tpu.memory_space<vmem>>, vector<1x3x256xf32>,
    %15 = vector.extract_strided_slice %6 {offsets = [27, 0], sizes = [3, 256], strides = [1, 1]} : vector<33x256xf32> to vector<3x256xf32>
    %16 = vector.extract_strided_slice %6 {offsets = [30, 0], sizes = [3, 256], strides = [1, 1]} : vector<33x256xf32> to vector<3x256xf32>
    %17 = math.absf %16 : vector<3x256xf32>
    %18 = math.absf %15 : vector<3x256xf32>
    %19 = arith.maximumf %17, %18 : vector<3x256xf32>
    %20 = arith.minimumf %17, %18 : vector<3x256xf32>
    %cst_12 = arith.constant 1.000000e-30 : f32
    %21 = vector.broadcast %cst_12 : f32 to vector<3x256xf32>
    %22 = arith.maximumf %19, %21 : vector<3x256xf32>
    %23 = tpu.reciprocal %22 : vector<3x256xf32> -> vector<3x256xf32>
    %24 = arith.mulf %20, %23 : vector<3x256xf32>
    %cst_13 = arith.constant 0.414213568 : f32
    %25 = vector.broadcast %cst_13 : f32 to vector<3x256xf32>
    %26 = arith.cmpf ogt, %24, %25 : vector<3x256xf32>
    %cst_14 = arith.constant 1.000000e+00 : f32
    %27 = vector.broadcast %cst_14 : f32 to vector<3x256xf32>
    %28 = arith.subf %24, %27 : vector<3x256xf32>
    %cst_15 = arith.constant 1.000000e+00 : f32
    %29 = vector.broadcast %cst_15 : f32 to vector<3x256xf32>
    %30 = arith.addf %24, %29 : vector<3x256xf32>
    %31 = tpu.reciprocal %30 : vector<3x256xf32> -> vector<3x256xf32>
    %32 = arith.mulf %28, %31 : vector<3x256xf32>
    %33 = arith.select %26, %32, %24 : vector<3x256xi1>, vector<3x256xf32>
    %34 = arith.mulf %33, %33 : vector<3x256xf32>
    %cst_16 = arith.constant 0.0805374458 : f32
    %35 = vector.broadcast %cst_16 : f32 to vector<3x256xf32>
    %36 = arith.mulf %35, %34 : vector<3x256xf32>
    %cst_17 = arith.constant 0.138776854 : f32
    %37 = vector.broadcast %cst_17 : f32 to vector<3x256xf32>
    %38 = arith.subf %36, %37 : vector<3x256xf32>
    %39 = arith.mulf %38, %34 : vector<3x256xf32>
    %cst_18 = arith.constant 0.199777111 : f32
    %40 = vector.broadcast %cst_18 : f32 to vector<3x256xf32>
    %41 = arith.addf %39, %40 : vector<3x256xf32>
    %42 = arith.mulf %41, %34 : vector<3x256xf32>
    %cst_19 = arith.constant 0.333329499 : f32
    %43 = vector.broadcast %cst_19 : f32 to vector<3x256xf32>
    %44 = arith.subf %42, %43 : vector<3x256xf32>
    %45 = arith.mulf %44, %34 : vector<3x256xf32>
    %46 = arith.mulf %45, %33 : vector<3x256xf32>
    %47 = arith.addf %46, %33 : vector<3x256xf32>
    %cst_20 = arith.constant 0.785398185 : f32
    %48 = vector.broadcast %cst_20 : f32 to vector<3x256xf32>
    %49 = arith.addf %47, %48 : vector<3x256xf32>
    %50 = arith.select %26, %49, %47 : vector<3x256xi1>, vector<3x256xf32>
    %51 = arith.cmpf ogt, %18, %17 : vector<3x256xf32>
    %cst_21 = arith.constant 1.57079637 : f32
    %52 = vector.broadcast %cst_21 : f32 to vector<3x256xf32>
    %53 = arith.subf %52, %50 : vector<3x256xf32>
    %54 = arith.select %51, %53, %50 : vector<3x256xi1>, vector<3x256xf32>
    %cst_22 = arith.constant 0.000000e+00 : f32
    %55 = vector.broadcast %cst_22 : f32 to vector<3x256xf32>
    %56 = arith.cmpf olt, %16, %55 : vector<3x256xf32>
    %cst_23 = arith.constant 3.14159274 : f32
    %57 = vector.broadcast %cst_23 : f32 to vector<3x256xf32>
    %58 = arith.subf %57, %54 : vector<3x256xf32>
    %59 = arith.select %56, %58, %54 : vector<3x256xi1>, vector<3x256xf32>
    %cst_24 = arith.constant 0.000000e+00 : f32
    %60 = vector.broadcast %cst_24 : f32 to vector<3x256xf32>
    %61 = arith.cmpf olt, %15, %60 : vector<3x256xf32>
    %cst_25 = arith.constant 0.000000e+00 : f32
    %62 = vector.broadcast %cst_25 : f32 to vector<3x256xf32>
    %63 = arith.subf %62, %59 : vector<3x256xf32>
    %64 = arith.select %61, %63, %59 : vector<3x256xi1>, vector<3x256xf32>
    %c0_26 = arith.constant 0 : index
    %c0_27 = arith.constant 0 : index
    %65 = vector.load %arg5[%c0_26, %c0_27] : memref<8x256xf32, #tpu.memory_space<vmem>>, vector<8x256xf32>
    %c0_28 = arith.constant 0 : index
    %c0_29 = arith.constant 0 : index
    %66 = vector.load %arg6[%c0_28, %c0_29] : memref<8x1xf32, #tpu.memory_space<vmem>>, vector<8x1xf32>
    %67 = tpu.iota {dimensions = array<i32: 0>} : vector<8x1xi32>
    %c6_i32 = arith.constant 6 : i32
    %68 = vector.broadcast %c6_i32 : i32 to vector<8x1xi32>
    %69 = arith.cmpi eq, %67, %68 : vector<8x1xi32>
    %70 = vector.extract_strided_slice %6 {offsets = [0, 0], sizes = [8, 256], strides = [1, 1]} : vector<33x256xf32> to vector<8x256xf32>
    %71 = vector.broadcast %66 : vector<8x1xf32> to vector<8x256xf32>
    %72 = arith.mulf %70, %71 : vector<8x256xf32>
    %73 = arith.addf %72, %65 : vector<8x256xf32>
    %74 = vector.extract_strided_slice %64 {offsets = [0, 0], sizes = [1, 256], strides = [1, 1]} : vector<3x256xf32> to vector<1x256xf32>
    %75 = vector.shape_cast %69 : vector<8x1xi1> to vector<8x1xi1>
    %76 = vector.broadcast %75 : vector<8x1xi1> to vector<8x256xi1>
    %77 = vector.shape_cast %74 : vector<1x256xf32> to vector<1x256xf32>
    %78 = vector.broadcast %77 : vector<1x256xf32> to vector<8x256xf32>
    %79 = arith.select %76, %78, %73 : vector<8x256xi1>, vector<8x256xf32>
    %c0_30 = arith.constant 0 : index
    %c0_31 = arith.constant 0 : index
    %c0_32 = arith.constant 0 : index
    %c0_33 = arith.constant 0 : index
    %80 = vector.load %arg9[%c0_30, %c0_31, %c0_32, %c0_33] : memref<1x3x8x256xf32, #tpu.memory_space<vmem>>, vector<1x1x8x256xf32>
    %81 = vector.shape_cast %80 : vector<1x1x8x256xf32> to vector<8x256xf32>
    %82 = vector.shape_cast %79 : vector<8x256xf32> to vector<1x1x8x256xf32>
    tpu.vector_store %arg9[%c0_30, %c0_31, %c0_32, %c0_33], %82 {strides = array<i32>} : memref<1x3x8x256xf32, #tpu.memory_space<vmem>>, vector<1x1x8x256xf32>,
    %83 = vector.extract_strided_slice %6 {offsets = [8, 0], sizes = [8, 256], strides = [1, 1]} : vector<33x256xf32> to vector<8x256xf32>
    %84 = vector.broadcast %66 : vector<8x1xf32> to vector<8x256xf32>
    %85 = arith.mulf %83, %84 : vector<8x256xf32>
    %86 = arith.addf %85, %65 : vector<8x256xf32>
    %87 = vector.extract_strided_slice %64 {offsets = [1, 0], sizes = [1, 256], strides = [1, 1]} : vector<3x256xf32> to vector<1x256xf32>
    %88 = vector.shape_cast %69 : vector<8x1xi1> to vector<8x1xi1>
    %89 = vector.broadcast %88 : vector<8x1xi1> to vector<8x256xi1>
    %90 = vector.shape_cast %87 : vector<1x256xf32> to vector<1x256xf32>
    %91 = vector.broadcast %90 : vector<1x256xf32> to vector<8x256xf32>
    %92 = arith.select %89, %91, %86 : vector<8x256xi1>, vector<8x256xf32>
    %c0_34 = arith.constant 0 : index
    %c1 = arith.constant 1 : index
    %c0_35 = arith.constant 0 : index
    %c0_36 = arith.constant 0 : index
    %93 = vector.load %arg9[%c0_34, %c1, %c0_35, %c0_36] : memref<1x3x8x256xf32, #tpu.memory_space<vmem>>, vector<1x1x8x256xf32>
    %94 = vector.shape_cast %93 : vector<1x1x8x256xf32> to vector<8x256xf32>
    %95 = vector.shape_cast %92 : vector<8x256xf32> to vector<1x1x8x256xf32>
    tpu.vector_store %arg9[%c0_34, %c1, %c0_35, %c0_36], %95 {strides = array<i32>} : memref<1x3x8x256xf32, #tpu.memory_space<vmem>>, vector<1x1x8x256xf32>,
    %96 = vector.extract_strided_slice %6 {offsets = [16, 0], sizes = [8, 256], strides = [1, 1]} : vector<33x256xf32> to vector<8x256xf32>
    %97 = vector.broadcast %66 : vector<8x1xf32> to vector<8x256xf32>
    %98 = arith.mulf %96, %97 : vector<8x256xf32>
    %99 = arith.addf %98, %65 : vector<8x256xf32>
    %100 = vector.extract_strided_slice %64 {offsets = [2, 0], sizes = [1, 256], strides = [1, 1]} : vector<3x256xf32> to vector<1x256xf32>
    %101 = vector.shape_cast %69 : vector<8x1xi1> to vector<8x1xi1>
    %102 = vector.broadcast %101 : vector<8x1xi1> to vector<8x256xi1>
    %103 = vector.shape_cast %100 : vector<1x256xf32> to vector<1x256xf32>
    %104 = vector.broadcast %103 : vector<1x256xf32> to vector<8x256xf32>
    %105 = arith.select %102, %104, %99 : vector<8x256xi1>, vector<8x256xf32>
    %c0_37 = arith.constant 0 : index
    %c2 = arith.constant 2 : index
    %c0_38 = arith.constant 0 : index
    %c0_39 = arith.constant 0 : index
    %106 = vector.load %arg9[%c0_37, %c2, %c0_38, %c0_39] : memref<1x3x8x256xf32, #tpu.memory_space<vmem>>, vector<1x1x8x256xf32>
    %107 = vector.shape_cast %106 : vector<1x1x8x256xf32> to vector<8x256xf32>
    %108 = vector.shape_cast %105 : vector<8x256xf32> to vector<1x1x8x256xf32>
    tpu.vector_store %arg9[%c0_37, %c2, %c0_38, %c0_39], %108 {strides = array<i32>} : memref<1x3x8x256xf32, #tpu.memory_space<vmem>>, vector<1x1x8x256xf32>,
    return
  }
  func.func @transform_0(%arg0: i32, %arg1: i32) -> (i32, i32, i32) {
    %c0_i32 = arith.constant 0 : i32
    %c0_i32_0 = arith.constant 0 : i32
    return %arg0, %c0_i32, %arg1 : i32, i32, i32
  }
  func.func @transform_1(%arg0: i32, %arg1: i32) -> (i32, i32) {
    %c0_i32 = arith.constant 0 : i32
    %c0_i32_0 = arith.constant 0 : i32
    %c0_i32_1 = arith.constant 0 : i32
    return %c0_i32, %c0_i32_0 : i32, i32
  }
  func.func @transform_2(%arg0: i32, %arg1: i32) -> (i32, i32) {
    %c0_i32 = arith.constant 0 : i32
    %c0_i32_0 = arith.constant 0 : i32
    %c0_i32_1 = arith.constant 0 : i32
    return %c0_i32, %c0_i32_0 : i32, i32
  }
  func.func @transform_3(%arg0: i32, %arg1: i32) -> (i32, i32) {
    %c0_i32 = arith.constant 0 : i32
    %c0_i32_0 = arith.constant 0 : i32
    return %c0_i32, %arg1 : i32, i32
  }
  func.func @transform_4(%arg0: i32, %arg1: i32) -> (i32, i32) {
    %c0_i32 = arith.constant 0 : i32
    %c0_i32_0 = arith.constant 0 : i32
    %c0_i32_1 = arith.constant 0 : i32
    return %c0_i32, %c0_i32_0 : i32, i32
  }
  func.func @transform_5(%arg0: i32, %arg1: i32) -> (i32, i32, i32) {
    %c0_i32 = arith.constant 0 : i32
    %c0_i32_0 = arith.constant 0 : i32
    return %arg0, %c0_i32, %arg1 : i32, i32, i32
  }
  func.func @transform_6(%arg0: i32, %arg1: i32) -> (i32, i32, i32) {
    %c0_i32 = arith.constant 0 : i32
    %c0_i32_0 = arith.constant 0 : i32
    return %arg0, %c0_i32, %arg1 : i32, i32, i32
  }
  func.func @transform_7(%arg0: i32, %arg1: i32) -> (i32, i32, i32, i32) {
    %c0_i32 = arith.constant 0 : i32
    %c0_i32_0 = arith.constant 0 : i32
    %c0_i32_1 = arith.constant 0 : i32
    return %arg0, %c0_i32, %c0_i32_0, %arg1 : i32, i32, i32, i32
  }
}

</mosaic_0001>

<llo_original>
// kernel: tpu_custom_call.1
$region0: #{tpu_custom_call.1}
  #allocation0 [shape = 'u32[]', space=smem, size = 0x4, offset = 0x4, fixed_abs, tag = 'smem constant byte address 0x4 - core index']
  #allocation1 [shape = 'u32[144,128]{1,0:T(1,128)}', space=vmem, size = 0x12000, scoped, tag = 'internal scratch']
  %s0 = inlined_call_operand.hbm [shape: f32[3,64,256], index: 0, kind: input, shape index: {}]
  %s1 = inlined_call_operand.vmem [shape: f32[33,64], index: 1, kind: input, shape index: {}]
  %s2 = inlined_call_operand.vmem [shape: f32[33,1], index: 2, kind: input, shape index: {}]
  %s3 = inlined_call_operand.hbm [shape: f32[8,256], index: 3, kind: input, shape index: {}]
  %s4 = inlined_call_operand.vmem [shape: f32[8,1], index: 4, kind: input, shape index: {}]
  %s5 = inlined_call_operand.hbm [shape: f32[3,3,256], index: 5, kind: output, shape index: {0}]
  %s6 = inlined_call_operand.hbm [shape: f32[3,24,256], index: 6, kind: output, shape index: {1}]
  %s7 = inlined_call_operand.hbm [shape: f32[3,3,8,256], index: 7, kind: output, shape index: {2}]
  %8 = xla_tuple %s5, %s6, %s7
  %s9 = sld [smem:[#allocation0]]
  $region77: #{tpu_custom_call.1} parent=0
    _
  %s11 = ssub.s32 1, %s9
  %s12 = scalar_select 0, %s11, %s9
  $region1: #{tpu_custom_call.1} parent=0
    #allocation2 [shape = 'u8[131072]{0}', space=vmem, size = 0x20000, scoped, tag = 'input window, operand 0']
    #allocation3 [shape = 's32[2]{0}', space=sflag, size = 0x8, scoped, tag = 'scoped memory for tpu_custom_call.1']
    #allocation4 [shape = 's32[2]{0}', space=sflag, size = 0x8, scoped, tag = 'scoped memory for tpu_custom_call.1']
    #allocation5 [shape = 'u8[8192]{0}', space=vmem, size = 0x2000, scoped, tag = 'input window, operand 3, single buffered']
    #allocation6 [shape = 's32[1]{0}', space=sflag, size = 0x4, scoped, tag = 'scoped memory for tpu_custom_call.1']
    #allocation7 [shape = 'u8[8192]{0}', space=vmem, size = 0x2000, scoped, tag = 'output window, operand 0']
    #allocation8 [shape = 'u8[49152]{0}', space=vmem, size = 0xc000, scoped, tag = 'output window, operand 1']
    #allocation9 [shape = 's32[2]{0}', space=sflag, size = 0x8, scoped, tag = 'scoped memory for tpu_custom_call.1']
    #allocation10 [shape = 'u8[49152]{0}', space=vmem, size = 0xc000, scoped, tag = 'output window, operand 2']
    %13 = vsyncpa [#allocation3], 0
    %s14 = scalar_lea.sflag [#allocation3], 1
    %15 = vsyncpa %s14, 0
    %16 = vsyncpa [#allocation6], 0
    %17 = vsyncpa [#allocation4], 0
    %s18 = scalar_lea.sflag [#allocation4], 1
    %19 = vsyncpa %s18, 0
    %20 = vsyncpa [#allocation9], 0
    %s21 = scalar_lea.sflag [#allocation9], 1
    %22 = vsyncpa %s21, 0
    loop: start=0, step=1, limit=5
    $region2: #{tpu_custom_call.1} parent=1 // loop_pre_header
      _
    $region3: #{tpu_custom_call.1} parent=1 // loop_header
      %s24 = sphi 0, %s28
      %p25 = scmp.ge.s32.totalorder %s24, 5
      %s31 = sphi 0, %s43
      %s32 = sphi 0, %s39
      %s33 = sphi 0, %s31
      %s34 = sphi 0, %s32
      %s35 = sphi 0, %s33
      %s36 = sphi 0, %s34
      %s48 = sphi 0, %s50
      %s51 = sphi 0, %s48
      %s52 = sphi 0, %s51
      %s68 = sphi 0, %s52
      %s72 = sphi 0, %s72
      %s74 = sphi 0, %s72
      %s75 = sphi 0, %s74
      %s89 = sphi 0, %s75
      %s93 = sphi 0, %s93
      %s95 = sphi 0, %s93
      %s96 = sphi 0, %s95
      %s110 = sphi 0, %s96
      %s116 = sphi 0, %s118
      %s119 = sphi 0, %s116
      %s120 = sphi 0, %s119
      %s136 = sphi 0, %s120
      %s140 = sphi 0, %s140
      %s142 = sphi 0, %s140
      %s143 = sphi 0, %s142
      %s157 = sphi 0, %s143
      %s165 = sphi 0, %s167
      %s168 = sphi 0, %s165
      %s169 = sphi 0, %s168
      %s185 = sphi 0, %s169
      %s193 = sphi 0, %s195
      %s196 = sphi 0, %s193
      %s197 = sphi 0, %s196
      %s213 = sphi 0, %s197
      %s221 = sphi 0, %s223
      %s224 = sphi 0, %s221
      %s225 = sphi 0, %s224
      %s241 = sphi 0, %s225
    $region4: #{tpu_custom_call.1} parent=1 // loop_header_branch
      %27 = sbr.rel (%p25) target = $region8
    $region5: #{tpu_custom_call.1} parent=1 // loop_body
      %s29 = ssub.s32 %s24, 1
      %s30 = ssub.s32 %s24, 2
      %s37 = sadd.s32 1, %s32
      %p38 = scmp.ge.s32.totalorder %s37, 1
      %s39 = scalar_select %p38, 0, %s37
      %s40 = sadd.s32 1, %s31
      %s41 = scalar_select %p38, %s40, %s31
      %p42 = scmp.ge.s32.totalorder %s41, 3
      %s43 = scalar_select %p42, 0, %s41
      %s44 = ssub.s32 %s31, %s43
      %s45 = ssub.s32 %s32, %s39
      %s46 = sor.u32 %s44, %s45
      %p47 = scmp.eq.s32.totalorder %s46, 0
      %s49 = sadd.s32 %s48, 1
      %s50 = scalar_select %p47, %s48, %s49
      %p53 = pneg %p47
      %p54 = scmp.eq.s32.totalorder %s24, 2
      %p55 = por %p53, %p54
      %p56 = scmp.ne.s32.totalorder %s48, %s51
      %p57 = scmp.eq.s32.totalorder %s24, 0
      %p58 = por %p56, %p57
      %p59 = scmp.ne.s32.totalorder %s48, %s51
      %p60 = scmp.eq.s32.totalorder %s29, 2
      %p61 = por %p59, %p60
      %p62 = scmp.ne.s32.totalorder %s51, %s52
      %p63 = scmp.eq.s32.totalorder %s29, 0
      %p64 = por %p62, %p63
      %p65 = scmp.ne.s32.totalorder %s51, %s52
      %p66 = scmp.eq.s32.totalorder %s30, 2
      %p67 = por %p65, %p66
      %p69 = scmp.ne.s32.totalorder %s52, %s68
      %p70 = scmp.eq.s32.totalorder %s30, 0
      %p71 = por %p69, %p70
      %s73 = sadd.s32 %s72, 1
      %p76 = scmp.eq.s32.totalorder %s24, 2
      %p77 = scmp.ne.s32.totalorder %s72, %s74
      %p78 = scmp.eq.s32.totalorder %s24, 0
      %p79 = por %p77, %p78
      %p80 = scmp.ne.s32.totalorder %s72, %s74
      %p81 = scmp.eq.s32.totalorder %s29, 2
      %p82 = por %p80, %p81
      %p83 = scmp.ne.s32.totalorder %s74, %s75
      %p84 = scmp.eq.s32.totalorder %s29, 0
      %p85 = por %p83, %p84
      %p86 = scmp.ne.s32.totalorder %s74, %s75
      %p87 = scmp.eq.s32.totalorder %s30, 2
      %p88 = por %p86, %p87
      %p90 = scmp.ne.s32.totalorder %s75, %s89
      %p91 = scmp.eq.s32.totalorder %s30, 0
      %p92 = por %p90, %p91
      %s94 = sadd.s32 %s93, 1
      %p97 = scmp.eq.s32.totalorder %s24, 2
      %p98 = scmp.ne.s32.totalorder %s93, %s95
      %p99 = scmp.eq.s32.totalorder %s24, 0
      %p100 = por %p98, %p99
      %p101 = scmp.ne.s32.totalorder %s93, %s95
      %p102 = scmp.eq.s32.totalorder %s29, 2
      %p103 = por %p101, %p102
      %p104 = scmp.ne.s32.totalorder %s95, %s96
      %p105 = scmp.eq.s32.totalorder %s29, 0
      %p106 = por %p104, %p105
      %p107 = scmp.ne.s32.totalorder %s95, %s96
      %p108 = scmp.eq.s32.totalorder %s30, 2
      %p109 = por %p107, %p108
      %p111 = scmp.ne.s32.totalorder %s96, %s110
      %p112 = scmp.eq.s32.totalorder %s30, 0
      %p113 = por %p111, %p112
      %s114 = ssub.s32 %s32, %s39
      %p115 = scmp.eq.s32.totalorder %s114, 0
      %s117 = sadd.s32 %s116, 1
      %s118 = scalar_select %p115, %s116, %s117
      %p121 = pneg %p115
      %p122 = scmp.eq.s32.totalorder %s24, 2
      %p123 = por %p121, %p122
      %p124 = scmp.ne.s32.totalorder %s116, %s119
      %p125 = scmp.eq.s32.totalorder %s24, 0
      %p126 = por %p124, %p125
      %p127 = scmp.ne.s32.totalorder %s116, %s119
      %p128 = scmp.eq.s32.totalorder %s29, 2
      %p129 = por %p127, %p128
      %p130 = scmp.ne.s32.totalorder %s119, %s120
      %p131 = scmp.eq.s32.totalorder %s29, 0
      %p132 = por %p130, %p131
      %p133 = scmp.ne.s32.totalorder %s119, %s120
      %p134 = scmp.eq.s32.totalorder %s30, 2
      %p135 = por %p133, %p134
      %p137 = scmp.ne.s32.totalorder %s120, %s136
      %p138 = scmp.eq.s32.totalorder %s30, 0
      %p139 = por %p137, %p138
      %s141 = sadd.s32 %s140, 1
      %p144 = scmp.eq.s32.totalorder %s24, 2
      %p145 = scmp.ne.s32.totalorder %s140, %s142
      %p146 = scmp.eq.s32.totalorder %s24, 0
      %p147 = por %p145, %p146
      %p148 = scmp.ne.s32.totalorder %s140, %s142
      %p149 = scmp.eq.s32.totalorder %s29, 2
      %p150 = por %p148, %p149
      %p151 = scmp.ne.s32.totalorder %s142, %s143
      %p152 = scmp.eq.s32.totalorder %s29, 0
      %p153 = por %p151, %p152
      %p154 = scmp.ne.s32.totalorder %s142, %s143
      %p155 = scmp.eq.s32.totalorder %s30, 2
      %p156 = por %p154, %p155
      %p158 = scmp.ne.s32.totalorder %s143, %s157
      %p159 = scmp.eq.s32.totalorder %s30, 0
      %p160 = por %p158, %p159
      %s161 = ssub.s32 %s31, %s43
      %s162 = ssub.s32 %s32, %s39
      %s163 = sor.u32 %s161, %s162
      %p164 = scmp.eq.s32.totalorder %s163, 0
      %s166 = sadd.s32 %s165, 1
      %s167 = scalar_select %p164, %s165, %s166
      %p170 = pneg %p164
      %p171 = scmp.eq.s32.totalorder %s24, 2
      %p172 = por %p170, %p171
      %p173 = scmp.ne.s32.totalorder %s165, %s168
      %p174 = scmp.eq.s32.totalorder %s24, 0
      %p175 = por %p173, %p174
      %p176 = scmp.ne.s32.totalorder %s165, %s168
      %p177 = scmp.eq.s32.totalorder %s29, 2
      %p178 = por %p176, %p177
      %p179 = scmp.ne.s32.totalorder %s168, %s169
      %p180 = scmp.eq.s32.totalorder %s29, 0
      %p181 = por %p179, %p180
      %p182 = scmp.ne.s32.totalorder %s168, %s169
      %p183 = scmp.eq.s32.totalorder %s30, 2
      %p184 = por %p182, %p183
      %p186 = scmp.ne.s32.totalorder %s169, %s185
      %p187 = scmp.eq.s32.totalorder %s30, 0
      %p188 = por %p186, %p187
      %s189 = ssub.s32 %s31, %s43
      %s190 = ssub.s32 %s32, %s39
      %s191 = sor.u32 %s189, %s190
      %p192 = scmp.eq.s32.totalorder %s191, 0
      %s194 = sadd.s32 %s193, 1
      %s195 = scalar_select %p192, %s193, %s194
      %p198 = pneg %p192
      %p199 = scmp.eq.s32.totalorder %s24, 2
      %p200 = por %p198, %p199
      %p201 = scmp.ne.s32.totalorder %s193, %s196
      %p202 = scmp.eq.s32.totalorder %s24, 0
      %p203 = por %p201, %p202
      %p204 = scmp.ne.s32.totalorder %s193, %s196
      %p205 = scmp.eq.s32.totalorder %s29, 2
      %p206 = por %p204, %p205
      %p207 = scmp.ne.s32.totalorder %s196, %s197
      %p208 = scmp.eq.s32.totalorder %s29, 0
      %p209 = por %p207, %p208
      %p210 = scmp.ne.s32.totalorder %s196, %s197
      %p211 = scmp.eq.s32.totalorder %s30, 2
      %p212 = por %p210, %p211
      %p214 = scmp.ne.s32.totalorder %s197, %s213
      %p215 = scmp.eq.s32.totalorder %s30, 0
      %p216 = por %p214, %p215
      %s217 = ssub.s32 %s31, %s43
      %s218 = ssub.s32 %s32, %s39
      %s219 = sor.u32 %s217, %s218
      %p220 = scmp.eq.s32.totalorder %s219, 0
      %s222 = sadd.s32 %s221, 1
      %s223 = scalar_select %p220, %s221, %s222
      %p226 = pneg %p220
      %p227 = scmp.eq.s32.totalorder %s24, 2
      %p228 = por %p226, %p227
      %p229 = scmp.ne.s32.totalorder %s221, %s224
      %p230 = scmp.eq.s32.totalorder %s24, 0
      %p231 = por %p229, %p230
      %p232 = scmp.ne.s32.totalorder %s221, %s224
      %p233 = scmp.eq.s32.totalorder %s29, 2
      %p234 = por %p232, %p233
      %p235 = scmp.ne.s32.totalorder %s224, %s225
      %p236 = scmp.eq.s32.totalorder %s29, 0
      %p237 = por %p235, %p236
      %p238 = scmp.ne.s32.totalorder %s224, %s225
      %p239 = scmp.eq.s32.totalorder %s30, 2
      %p240 = por %p238, %p239
      %p242 = scmp.ne.s32.totalorder %s225, %s241
      %p243 = scmp.eq.s32.totalorder %s30, 0
      %p244 = por %p242, %p243
      %p245 = scmp.le.s32.totalorder 1, %s24
      %p246 = scmp.lt.s32.totalorder %s24, 4
      %p247 = pnand %p245, %p246
      %p248 = pneg %p247
      // Predicated region
      $region9: #{tpu_custom_call.1} parent=5 // pred_check
        _
      $region10: #{tpu_custom_call.1} parent=5 // pred_check_branch
        %250 = sbr.rel (%p247) target = $region12
      $region11: #{tpu_custom_call.1} parent=5 // pred_region
        %s251 = ssub.s32 %s24, 1
        // Predicated region
        $region13: #{tpu_custom_call.1} parent=11 // pred_check
          %p252 = pneg %p85
        $region14: #{tpu_custom_call.1} parent=11 // pred_check_branch
          %254 = sbr.rel (%p252) target = $region16
        $region15: #{tpu_custom_call.1} parent=11 // pred_region
          _
        $region16: #{tpu_custom_call.1} parent=11 // pred_fallthru
          _
        // Predicated region
        $region17: #{tpu_custom_call.1} parent=11 // pred_check
          %p255 = pneg %p106
        $region18: #{tpu_custom_call.1} parent=11 // pred_check_branch
          %257 = sbr.rel (%p255) target = $region20
        $region19: #{tpu_custom_call.1} parent=11 // pred_region
          _
        $region20: #{tpu_custom_call.1} parent=11 // pred_fallthru
          _
        // Predicated region
        $region21: #{tpu_custom_call.1} parent=11 // pred_check
          %p258 = pneg %p132
        $region22: #{tpu_custom_call.1} parent=11 // pred_check_branch
          %260 = sbr.rel (%p258) target = $region24
        $region23: #{tpu_custom_call.1} parent=11 // pred_region
          %s261 = smul.u32 2, %s34
          %s263 = ssub.s32 256, 256
          %264 = vsyncadd [#allocation6], %s263
          %s265 = smul.addr %s261, 128
          %s266 = scalar_lea.hbm %s3, %s265
          %s268 = sshll.u32 [#allocation5], 4
          %s269 = int_to_ptr.vmem [resolvable:$true] %s268
          %271 = dma.hbm_to_vmem [thread:$0]  %s266, 256, %s269, [#allocation6]
        $region24: #{tpu_custom_call.1} parent=11 // pred_fallthru
          _
        // Predicated region
        $region25: #{tpu_custom_call.1} parent=11 // pred_check
          %p272 = pneg %p153
        $region26: #{tpu_custom_call.1} parent=11 // pred_check_branch
          %274 = sbr.rel (%p272) target = $region28
        $region27: #{tpu_custom_call.1} parent=11 // pred_region
          _
        $region28: #{tpu_custom_call.1} parent=11 // pred_fallthru
          _
      $region12: #{tpu_custom_call.1} parent=5 // pred_fallthru
        _
      %p275 = scmp.lt.s32.totalorder %s24, 3
      // Predicated region
      $region29: #{tpu_custom_call.1} parent=5 // pred_check
        %p276 = pneg %p275
      $region30: #{tpu_custom_call.1} parent=5 // pred_check_branch
        %278 = sbr.rel (%p276) target = $region32
      $region31: #{tpu_custom_call.1} parent=5 // pred_region
        // Predicated region
        $region33: #{tpu_custom_call.1} parent=31 // pred_check
          %p279 = pneg %p58
        $region34: #{tpu_custom_call.1} parent=31 // pred_check_branch
          %281 = sbr.rel (%p279) target = $region36
        $region35: #{tpu_custom_call.1} parent=31 // pred_region
          %s282 = sand.u32 %s48, 1
          %s283 = scalar_lea.sflag [#allocation3], %s282
          %s284 = sand.u32 %s48, 1
          %s285 = smul.addr %s284, 128
          %s286 = scalar_lea.vmem [#allocation2], %s285
          %s287 = smul.u32 2, %s32
          %s289 = ssub.s32 2048, 2048
          %290 = vsyncadd %s283, %s289
          %s291 = smul.addr %s31, 16
          %s292 = sadd.s32 %s287, %s291
          %s293 = smul.addr %s292, 128
          %s294 = scalar_lea.hbm %s0, %s293
          %s295 = sshll.u32 %s286, 4
          %s296 = int_to_ptr.vmem [resolvable:$true] %s295
          %301 = dma.hbm_to_vmem [thread:$0]  %s294, 2048, %s296, %s283, 256, 256, 16
        $region36: #{tpu_custom_call.1} parent=31 // pred_fallthru
          _
      $region32: #{tpu_custom_call.1} parent=5 // pred_fallthru
        _
      %p302 = scmp.le.s32.totalorder 1, %s24
      %p303 = scmp.lt.s32.totalorder %s24, 4
      %p304 = pnand %p302, %p303
      %p305 = pneg %p304
      // Predicated region
      $region37: #{tpu_custom_call.1} parent=5 // pred_check
        _
      $region38: #{tpu_custom_call.1} parent=5 // pred_check_branch
        %307 = sbr.rel (%p304) target = $region40
      $region39: #{tpu_custom_call.1} parent=5 // pred_region
        %s308 = ssub.s32 %s24, 1
        %s309 = sand.u32 %s51, 1
        %s310 = scalar_lea.sflag [#allocation3], %s309
        %s311 = sand.u32 %s51, 1
        %s312 = smul.addr %s311, 128
        %s313 = scalar_lea.vmem [#allocation2], %s312
        // Predicated region
        $region41: #{tpu_custom_call.1} parent=39 // pred_check
          %p314 = pneg %p64
        $region42: #{tpu_custom_call.1} parent=39 // pred_check_branch
          %316 = sbr.rel (%p314) target = $region44
        $region43: #{tpu_custom_call.1} parent=39 // pred_region
          %317 = dma.done %s310, 2048
        $region44: #{tpu_custom_call.1} parent=39 // pred_fallthru
          _
        // Predicated region
        $region45: #{tpu_custom_call.1} parent=39 // pred_check
          %p318 = pneg %p132
        $region46: #{tpu_custom_call.1} parent=39 // pred_check_branch
          %320 = sbr.rel (%p318) target = $region48
        $region47: #{tpu_custom_call.1} parent=39 // pred_region
          %321 = dma.done [#allocation6], 256
        $region48: #{tpu_custom_call.1} parent=39 // pred_fallthru
          _
        %s322 = sand.u32 %s51, 1
        %s323 = scalar_lea.sflag [#allocation3], %s322
        %s324 = sand.u32 %s51, 1
        %s325 = smul.addr %s324, 128
        %s326 = scalar_lea.vmem [#allocation2], %s325
        %p327 = pneg %p64
        %p328 = pneg %p61
        %p329 = pneg %p85
        %p330 = pneg %p82
        %p331 = pneg %p106
        %p332 = pneg %p103
        %p333 = pneg %p132
        %p334 = pneg %p129
        %p335 = pneg %p153
        %p336 = pneg %p150
        %p337 = pneg %p181
        %p338 = pneg %p178
        %s339 = sand.u32 %s168, 1
        %s340 = scalar_lea.sflag [#allocation4], %s339
        %s341 = sand.u32 %s168, 1
        %s342 = smul.addr %s341, 8
        %s343 = scalar_lea.vmem [#allocation7], %s342
        %p344 = pneg %p209
        %p345 = pneg %p206
        %s346 = sand.u32 %s29, 1
        %s347 = scalar_lea.sflag [#allocation9], %s346
        %s348 = sand.u32 %s196, 1
        %s349 = smul.addr %s348, 48
        %s350 = scalar_lea.vmem [#allocation8], %s349
        %p351 = pneg %p237
        %p352 = pneg %p234
        %s353 = sand.u32 %s29, 1
        %s354 = scalar_lea.sflag [#allocation9], %s353
        %s355 = sand.u32 %s224, 1
        %s356 = smul.addr %s355, 48
        %s357 = scalar_lea.vmem [#allocation10], %s356
        %s358 = smul.u32 2, %s34
        %s359 = smul.u32 2, %s34
        %s360 = smul.u32 2, %s34
        %s361 = smul.u32 2, %s34
        %s362 = smul.u32 2, %s34
        %v363 = vld [vmem:[%s1] sm:$0xff]
        %v364 = vld [vmem:[%s1 + $0x8] sm:$0xff]
        %v365 = vld [vmem:[%s1 + $0x10] sm:$0xff]
        %v366 = vld [vmem:[%s1 + $0x18] sm:$0xff]
        %v367 = vld [vmem:[%s1 + $0x20] sm:$0x1]
        %v368 = vld [vmem:[%s313] sm:$0xff]
        %v369 = vld [vmem:[%s313 + $0x8] sm:$0xff]
        %v370 = vld [vmem:[%s313 + $0x10] sm:$0xff]
        %v371 = vld [vmem:[%s313 + $0x18] sm:$0xff]
        %v372 = vld [vmem:[%s313 + $0x20] sm:$0xff]
        %v373 = vld [vmem:[%s313 + $0x28] sm:$0xff]
        %v374 = vld [vmem:[%s313 + $0x30] sm:$0xff]
        %v375 = vld [vmem:[%s313 + $0x38] sm:$0xff]
        %v376 = vld [vmem:[%s313 + $0x40] sm:$0xff]
        %v377 = vld [vmem:[%s313 + $0x48] sm:$0xff]
        %v378 = vld [vmem:[%s313 + $0x50] sm:$0xff]
        %v379 = vld [vmem:[%s313 + $0x58] sm:$0xff]
        %v380 = vld [vmem:[%s313 + $0x60] sm:$0xff]
        %v381 = vld [vmem:[%s313 + $0x68] sm:$0xff]
        %v382 = vld [vmem:[%s313 + $0x70] sm:$0xff]
        %v383 = vld [vmem:[%s313 + $0x78] sm:$0xff]
        %v384 = vld [vmem:[%s2] sm:$0xff]
        %v385 = vld [vmem:[%s2 + $0x8] sm:$0xff]
        %v386 = vld [vmem:[%s2 + $0x10] sm:$0xff]
        %v387 = vld [vmem:[%s2 + $0x18] sm:$0xff]
        %v388 = vld [vmem:[%s2 + $0x20] sm:$0x1]
        %390 = vset.pattern.permute.xlu0 0
        %391 = vperm.xlu0 %390, %v384
        %v392 = vpop.permute.xlu0 %391
        %395 = vset.pattern.permute.xlu0 0
        %396 = vperm.xlu0 %395, %v385
        %v397 = vpop.permute.xlu0 %396
        %400 = vset.pattern.permute.xlu0 0
        %401 = vperm.xlu0 %400, %v386
        %v402 = vpop.permute.xlu0 %401
        %405 = vset.pattern.permute.xlu0 0
        %406 = vperm.xlu0 %405, %v387
        %v407 = vpop.permute.xlu0 %406
        %410 = vset.pattern.permute.xlu0 0
        %411 = vperm.xlu0 %410, %v388
        %v412 = vpop.permute.xlu0 %411
        %vm414 = vcmask 523264
        %v416 = vsel %vm414, %v363, 0
        %v419 = vsel %vm414, %v364, 0
        %v422 = vsel %vm414, %v365, 0
        %v425 = vsel %vm414, %v366, 0
        %v428 = vsel %vm414, %v367, 0
        %430 = vmatprep.subr.mxu0 0.0
        %431 = vmatpush1.msra.mxu0 0.0
        %432 = vmatprep.subr.mxu0 0.0
        %433 = vmatpush1.msra.mxu0 0.0
        %434 = vmatprep.subr.mxu0 0.0
        %435 = vmatpush1.msra.mxu0 0.0
        %436 = vmatprep.subr.mxu0 0.0
        %437 = vmatpush1.msra.mxu0 0.0
        %438 = vmatprep.subr.mxu0 0.0
        %439 = vmatpush1.msra.mxu0 0.0
        %440 = vmatprep.subr.mxu0 0.0
        %441 = vmatpush1.msra.mxu0 0.0
        %442 = vmatprep.subr.mxu0 0.0
        %443 = vmatpush1.msra.mxu0 0.0
        %444 = vmatprep.subr.mxu0 0.0
        %445 = vmatpush1.msra.mxu0 0.0
        %446 = vmatprep.subr.mxu0 %v383
        %447 = vmatpush1.msra.mxu0 %v382
        %448 = vmatprep.subr.mxu0 %v381
        %449 = vmatpush1.msra.mxu0 %v380
        %450 = vmatprep.subr.mxu0 %v379
        %451 = vmatpush1.msra.mxu0 %v378
        %452 = vmatprep.subr.mxu0 %v377
        %453 = vmatpush1.msra.mxu0 %v376
        %454 = vmatprep.subr.mxu0 %v375
        %455 = vmatpush1.msra.mxu0 %v374
        %456 = vmatprep.subr.mxu0 %v373
        %457 = vmatpush1.msra.mxu0 %v372
        %458 = vmatprep.subr.mxu0 %v371
        %459 = vmatpush1.msra.mxu0 %v370
        %460 = vmatprep.subr.mxu0 %v369
        %461 = vmatpush1.msra.mxu0 %v368
        %462 = vmatprep.subr.mxu0 0.0
        %463 = vmatpush2.msra.mxu0 0.0
        %464 = vmatprep.subr.mxu0 0.0
        %465 = vmatpush2.msra.mxu0 0.0
        %466 = vmatprep.subr.mxu0 0.0
        %467 = vmatpush2.msra.mxu0 0.0
        %468 = vmatprep.subr.mxu0 0.0
        %469 = vmatpush2.msra.mxu0 0.0
        %470 = vmatprep.subr.mxu0 0.0
        %471 = vmatpush2.msra.mxu0 0.0
        %472 = vmatprep.subr.mxu0 0.0
        %473 = vmatpush2.msra.mxu0 0.0
        %474 = vmatprep.subr.mxu0 0.0
        %475 = vmatpush2.msra.mxu0 0.0
        %476 = vmatprep.subr.mxu0 0.0
        %477 = vmatpush2.msra.mxu0 0.0
        %478 = vmatprep.subr.mxu0 0.0
        %479 = vmatpush2.msra.mxu0 0.0
        %480 = vmatprep.subr.mxu0 0.0
        %481 = vmatpush2.msra.mxu0 0.0
        %482 = vmatprep.subr.mxu0 0.0
        %483 = vmatpush2.msra.mxu0 0.0
        %484 = vmatprep.subr.mxu0 0.0
        %485 = vmatpush2.msra.mxu0 0.0
        %486 = vmatprep.subr.mxu0 0.0
        %487 = vmatpush2.msra.mxu0 0.0
        %488 = vmatprep.subr.mxu0 0.0
        %489 = vmatpush2.msra.mxu0 0.0
        %490 = vmatprep.subr.mxu0 0.0
        %491 = vmatpush2.msra.mxu0 0.0
        %492 = vmatprep.subr.mxu0 0.0
        %493 = vmatpush2.msra.mxu0 0.0
        %494 = vmatprep.mubr.f32.mxu0 0.0
        %495 = vmatmul.mubr.f32.gmra.mxu0 %v416
        %v496 = vpop.f32.mrf.mxu0
        %v497 = vadd.f32 %v392, %v496
        %v498 = vpop.f32.mrf.mxu0
        %v499 = vadd.f32 %v392, %v498
        %500 = vmatprep.mubr.f32.mxu0 0.0
        %501 = vmatmul.mubr.f32.gmra.mxu0 %v419
        %v502 = vpop.f32.mrf.mxu0
        %v503 = vadd.f32 %v397, %v502
        %v504 = vpop.f32.mrf.mxu0
        %v505 = vadd.f32 %v397, %v504
        %506 = vmatprep.mubr.f32.mxu0 0.0
        %507 = vmatmul.mubr.f32.gmra.mxu0 %v422
        %v508 = vpop.f32.mrf.mxu0
        %v509 = vadd.f32 %v402, %v508
        %v510 = vpop.f32.mrf.mxu0
        %v511 = vadd.f32 %v402, %v510
        %512 = vmatprep.mubr.f32.mxu0 0.0
        %513 = vmatmul.mubr.f32.gmra.mxu0 %v425
        %v514 = vpop.f32.mrf.mxu0
        %v515 = vadd.f32 %v407, %v514
        %v516 = vpop.f32.mrf.mxu0
        %v517 = vadd.f32 %v407, %v516
        %518 = vmatprep.mubr.f32.mxu0 0.0
        %519 = vmatmul.mubr.f32.gmra.mxu0 %v428
        %v520 = vpop.f32.mrf.mxu0
        %v521 = vadd.f32 %v412, %v520
        %v522 = vpop.f32.mrf.mxu0
        %v523 = vadd.f32 %v412, %v522
        %524 = vdwg.mxu0
        %525 = vst [vmem:[%s350] sm:$0xff] %v497
        %526 = vst [vmem:[%s350 + $0x8] sm:$0xff] %v499
        %527 = vst [vmem:[%s350 + $0x10] sm:$0xff] %v503
        %528 = vst [vmem:[%s350 + $0x18] sm:$0xff] %v505
        %529 = vst [vmem:[%s350 + $0x20] sm:$0xff] %v509
        %530 = vst [vmem:[%s350 + $0x28] sm:$0xff] %v511
        %v533 = vcombine.low %v515, %v517
        %535 = vst [vmem:[%s343] sm:$0x77] %v533
        %v536 = vand.u32 2147483647, %v515
        %v537 = vand.u32 2147483647, %v517
        %v538 = vand.u32 2147483647, %v521
        %v539 = vand.u32 2147483647, %v523
        %v542 = vrot.slane %v536, 5
        %v543 = vrot.slane %v537, 5
        %v546 = vmax.f32 %v536, %v542
        %v547 = vmax.f32 %v537, %v543
        %v548 = vmax.f32 %v538, %v542
        %v549 = vmax.f32 %v539, %v543
        %v550 = vmin.f32 %v536, %v542
        %v551 = vmin.f32 %v537, %v543
        %v552 = vmin.f32 %v538, %v542
        %v553 = vmin.f32 %v539, %v543
        %v554 = vmax.f32 %v546, 1e-30
        %v555 = vmax.f32 %v547, 1e-30
        %v556 = vmax.f32 %v548, 1e-30
        %v557 = vmax.f32 %v549, 1e-30
        %v558 = vrcp.pop %v554
        %v559 = vrcp.pop %v555
        %v560 = vrcp.pop %v556
        %v561 = vrcp.pop %v557
        %v562 = vmul.f32 %v550, %v558
        %v563 = vmul.f32 %v551, %v559
        %v564 = vmul.f32 %v552, %v560
        %v565 = vmul.f32 %v553, %v561
        %vm566 = vcmp.gt.f32.partialorder %v562, 0.41421357
        %vm567 = vcmp.gt.f32.partialorder %v563, 0.41421357
        %vm568 = vcmp.gt.f32.partialorder %v564, 0.41421357
        %vm569 = vcmp.gt.f32.partialorder %v565, 0.41421357
        %v570 = vsub.f32 %v562, 1.0
        %v571 = vsub.f32 %v563, 1.0
        %v572 = vsub.f32 %v564, 1.0
        %v573 = vsub.f32 %v565, 1.0
        %v574 = vadd.f32 %v562, 1.0
        %v575 = vadd.f32 %v563, 1.0
        %v576 = vadd.f32 %v564, 1.0
        %v577 = vadd.f32 %v565, 1.0
        %v578 = vrcp.pop %v574
        %v579 = vrcp.pop %v575
        %v580 = vrcp.pop %v576
        %v581 = vrcp.pop %v577
        %v582 = vmul.f32 %v570, %v578
        %v583 = vmul.f32 %v571, %v579
        %v584 = vmul.f32 %v572, %v580
        %v585 = vmul.f32 %v573, %v581
        %v586 = vsel %vm566, %v582, %v562
        %v587 = vsel %vm567, %v583, %v563
        %v588 = vsel %vm568, %v584, %v564
        %v589 = vsel %vm569, %v585, %v565
        %v590 = vmul.f32 %v586, %v586
        %v591 = vmul.f32 %v587, %v587
        %v592 = vmul.f32 %v588, %v588
        %v593 = vmul.f32 %v589, %v589
        %v594 = vmul.f32 %v590, 0.080537446
        %v595 = vmul.f32 %v591, 0.080537446
        %v596 = vmul.f32 %v592, 0.080537446
        %v597 = vmul.f32 %v593, 0.080537446
        %v598 = vsub.f32 %v594, 0.13877685
        %v599 = vsub.f32 %v595, 0.13877685
        %v600 = vsub.f32 %v596, 0.13877685
        %v601 = vsub.f32 %v597, 0.13877685
        %v602 = vmul.f32 %v598, %v590
        %v603 = vmul.f32 %v599, %v591
        %v604 = vmul.f32 %v600, %v592
        %v605 = vmul.f32 %v601, %v593
        %v606 = vadd.f32 %v602, 0.19977711
        %v607 = vadd.f32 %v603, 0.19977711
        %v608 = vadd.f32 %v604, 0.19977711
        %v609 = vadd.f32 %v605, 0.19977711
        %v610 = vmul.f32 %v606, %v590
        %v611 = vmul.f32 %v607, %v591
        %v612 = vmul.f32 %v608, %v592
        %v613 = vmul.f32 %v609, %v593
        %v614 = vsub.f32 %v610, 0.3333295
        %v615 = vsub.f32 %v611, 0.3333295
        %v616 = vsub.f32 %v612, 0.3333295
        %v617 = vsub.f32 %v613, 0.3333295
        %v618 = vmul.f32 %v614, %v590
        %v619 = vmul.f32 %v615, %v591
        %v620 = vmul.f32 %v616, %v592
        %v621 = vmul.f32 %v617, %v593
        %v622 = vmul.f32 %v618, %v586
        %v623 = vmul.f32 %v619, %v587
        %v624 = vmul.f32 %v620, %v588
        %v625 = vmul.f32 %v621, %v589
        %v626 = vadd.f32 %v622, %v586
        %v627 = vadd.f32 %v623, %v587
        %v628 = vadd.f32 %v624, %v588
        %v629 = vadd.f32 %v625, %v589
        %v630 = vadd.f32 %v626, 0.7853982
        %v631 = vadd.f32 %v627, 0.7853982
        %v632 = vadd.f32 %v628, 0.7853982
        %v633 = vadd.f32 %v629, 0.7853982
        %v634 = vsel %vm566, %v630, %v626
        %v635 = vsel %vm567, %v631, %v627
        %v636 = vsel %vm568, %v632, %v628
        %v637 = vsel %vm569, %v633, %v629
        %vm640 = vcmask 1044480
        %v641 = vrot.slane %v536, 3
        %v642 = vrot.slane %v538, 3
        %v643 = vsel %vm640, %v641, %v642
        %v644 = vrot.slane %v537, 3
        %v645 = vrot.slane %v539, 3
        %v646 = vsel %vm640, %v644, %v645
        %vm649 = vcmp.gt.f32.partialorder %v536, %v643
        %vm650 = vcmp.gt.f32.partialorder %v537, %v646
        %v651 = vsub.f32 1.5707964, %v634
        %v652 = vsub.f32 1.5707964, %v635
        %v653 = vsub.f32 1.5707964, %v636
        %v654 = vsub.f32 1.5707964, %v637
        %v659 = vrot.slane %v651, 3
        %v660 = vrot.slane %v653, 3
        %v661 = vsel %vm640, %v659, %v660
        %v662 = vrot.slane %v652, 3
        %v663 = vrot.slane %v654, 3
        %v664 = vsel %vm640, %v662, %v663
        %v671 = vrot.slane %v634, 3
        %v672 = vrot.slane %v636, 3
        %v673 = vsel %vm640, %v671, %v672
        %v674 = vrot.slane %v635, 3
        %v675 = vrot.slane %v637, 3
        %v676 = vsel %vm640, %v674, %v675
        %v679 = vsel %vm649, %v661, %v673
        %v680 = vsel %vm650, %v664, %v676
        %vm681 = vcmp.lt.f32.partialorder %v515, 0.0
        %vm682 = vcmp.lt.f32.partialorder %v517, 0.0
        %vm683 = vcmp.lt.f32.partialorder %v521, 0.0
        %vm684 = vcmp.lt.f32.partialorder %v523, 0.0
        %v685 = vsub.f32 3.1415927, %v679
        %v686 = vsub.f32 3.1415927, %v680
        %v689 = vrot.slane %v685, 5
        %v690 = vrot.slane %v686, 5
        %v695 = vrot.slane %v679, 5
        %v696 = vrot.slane %v680, 5
        %v699 = vsel %vm681, %v689, %v695
        %v700 = vsel %vm682, %v690, %v696
        %v701 = vsel %vm683, %v689, %v695
        %v702 = vsel %vm684, %v690, %v696
        %v703 = vsub.f32 0.0, %v699
        %v704 = vsub.f32 0.0, %v700
        %v705 = vsub.f32 0.0, %v701
        %v706 = vsub.f32 0.0, %v702
        %v711 = vrot.slane %v703, 3
        %v712 = vrot.slane %v705, 3
        %v713 = vsel %vm640, %v711, %v712
        %v714 = vrot.slane %v704, 3
        %v715 = vrot.slane %v706, 3
        %v716 = vsel %vm640, %v714, %v715
        %v723 = vrot.slane %v699, 3
        %v724 = vrot.slane %v701, 3
        %v725 = vsel %vm640, %v723, %v724
        %v726 = vrot.slane %v700, 3
        %v727 = vrot.slane %v702, 3
        %v728 = vsel %vm640, %v726, %v727
        %v731 = vsel %vm681, %v713, %v725
        %v732 = vsel %vm682, %v716, %v728
        %v733 = vld [vmem:[#allocation5] sm:$0xff]
        %v734 = vld [vmem:[#allocation5 + $0x8] sm:$0xff]
        %v735 = vld [vmem:[%s4] sm:$0xff]
        %v736 = vlaneseq
        %v737 = vshrl.u32 %v736, 7
        %vm738 = vcmp.eq.s32.totalorder %v737, 6
        %740 = vset.pattern.permute.xlu0 0
        %741 = vperm.xlu0 %740, %v735
        %v742 = vpop.permute.xlu0 %741
        %v744 = vmul.f32 %v497, %v742
        %v745 = vmul.f32 %v499, %v742
        %v746 = vadd.f32 %v744, %v733
        %v747 = vadd.f32 %v745, %v734
        %v748 = vsel %vm738, 1, 0
        %vm749 = vcmp.eq.s32.totalorder %v748, 1
        %v750 = vlaneseq
        %v751 = vshrl.u32 %v750, 7
        %v752 = vsub.s32 3, %v751
        %v753 = vrot.slane %v731, %v752
        %v754 = vlaneseq
        %v755 = vshrl.u32 %v754, 7
        %v756 = vsub.s32 3, %v755
        %v757 = vrot.slane %v732, %v756
        %v758 = vsel %vm749, %v753, %v746
        %v759 = vsel %vm749, %v757, %v747
        %760 = vst [vmem:[%s357] sm:$0xff] %v758
        %761 = vst [vmem:[%s357 + $0x8] sm:$0xff] %v759
        %v762 = vmul.f32 %v503, %v742
        %v763 = vmul.f32 %v505, %v742
        %v764 = vadd.f32 %v762, %v733
        %v765 = vadd.f32 %v763, %v734
        %v766 = vlaneseq
        %v767 = vshrl.u32 %v766, 7
        %v768 = vsub.s32 4, %v767
        %v769 = vrot.slane %v731, %v768
        %v770 = vlaneseq
        %v771 = vshrl.u32 %v770, 7
        %v772 = vsub.s32 4, %v771
        %v773 = vrot.slane %v732, %v772
        %v774 = vsel %vm749, %v769, %v764
        %v775 = vsel %vm749, %v773, %v765
        %s776 = scalar_lea.vmem %s357, 16 [#allocation10]
        %777 = vst [vmem:[%s776] sm:$0xff] %v774
        %778 = vst [vmem:[%s776 + $0x8] sm:$0xff] %v775
        %v779 = vmul.f32 %v509, %v742
        %v780 = vmul.f32 %v511, %v742
        %v781 = vadd.f32 %v779, %v733
        %v782 = vadd.f32 %v780, %v734
        %v783 = vlaneseq
        %v784 = vshrl.u32 %v783, 7
        %v785 = vsub.s32 5, %v784
        %v786 = vrot.slane %v731, %v785
        %v787 = vlaneseq
        %v788 = vshrl.u32 %v787, 7
        %v789 = vsub.s32 5, %v788
        %v790 = vrot.slane %v732, %v789
        %v791 = vsel %vm749, %v786, %v781
        %v792 = vsel %vm749, %v790, %v782
        %s793 = scalar_lea.vmem %s357, 32 [#allocation10]
        %794 = vst [vmem:[%s793] sm:$0xff] %v791
        %795 = vst [vmem:[%s793 + $0x8] sm:$0xff] %v792
        %s796 = sand.u32 %s168, 1
        %s797 = scalar_lea.sflag [#allocation4], %s796
        %s798 = sand.u32 %s168, 1
        %s799 = smul.addr %s798, 8
        %s800 = scalar_lea.vmem [#allocation7], %s799
        %s801 = sand.u32 %s29, 1
        %s802 = scalar_lea.sflag [#allocation9], %s801
        %s803 = sand.u32 %s196, 1
        %s804 = smul.addr %s803, 48
        %s805 = scalar_lea.vmem [#allocation8], %s804
        %s806 = sand.u32 %s29, 1
        %s807 = scalar_lea.sflag [#allocation9], %s806
        %s808 = sand.u32 %s224, 1
        %s809 = smul.addr %s808, 48
        %s810 = scalar_lea.vmem [#allocation10], %s809
        // Predicated region
        $region49: #{tpu_custom_call.1} parent=39 // pred_check
          %p811 = pneg %p178
        $region50: #{tpu_custom_call.1} parent=39 // pred_check_branch
          %813 = sbr.rel (%p811) target = $region52
        $region51: #{tpu_custom_call.1} parent=39 // pred_region
          %s814 = smul.u32 2, %s34
          %s816 = ssub.s32 128, 128
          %817 = vsyncadd %s797, %s816
          %s818 = smul.addr %s33, 2
          %s819 = sadd.s32 %s814, %s818
          %s820 = smul.addr %s819, 64
          %s821 = scalar_lea.hbm %s5, %s820
          %s823 = sshll.u32 %s800, 4
          %s824 = int_to_ptr.vmem [resolvable:$true] %s823
          %826 = dma.vmem_to_hbm [thread:$0]  %s824, 128, %s821, %s797
        $region52: #{tpu_custom_call.1} parent=39 // pred_fallthru
          _
        // Predicated region
        $region53: #{tpu_custom_call.1} parent=39 // pred_check
          %p827 = pneg %p206
        $region54: #{tpu_custom_call.1} parent=39 // pred_check_branch
          %829 = sbr.rel (%p827) target = $region56
        $region55: #{tpu_custom_call.1} parent=39 // pred_region
          %s830 = smul.u32 2, %s34
          %s832 = ssub.s32 768, 768
          %833 = vsyncadd %s802, %s832
          %s834 = smul.addr %s33, 6
          %s835 = sadd.s32 %s830, %s834
          %s836 = smul.addr %s835, 128
          %s837 = scalar_lea.hbm %s6, %s836
          %s838 = sshll.u32 %s805, 4
          %s839 = int_to_ptr.vmem [resolvable:$true] %s838
          %844 = dma.vmem_to_hbm [thread:$0]  %s839, 768, %s837, %s802, 256, 256, 16
        $region56: #{tpu_custom_call.1} parent=39 // pred_fallthru
          _
        // Predicated region
        $region57: #{tpu_custom_call.1} parent=39 // pred_check
          %p845 = pneg %p234
        $region58: #{tpu_custom_call.1} parent=39 // pred_check_branch
          %847 = sbr.rel (%p845) target = $region60
        $region59: #{tpu_custom_call.1} parent=39 // pred_region
          %s848 = smul.u32 2, %s34
          %s850 = ssub.s32 768, 768
          %851 = vsyncadd %s807, %s850
          %s852 = smul.addr %s33, 6
          %s853 = sadd.s32 %s848, %s852
          %s854 = smul.addr %s853, 128
          %s855 = scalar_lea.hbm %s7, %s854
          %s856 = sshll.u32 %s810, 4
          %s857 = int_to_ptr.vmem [resolvable:$true] %s856
          %862 = dma.vmem_to_hbm [thread:$0]  %s857, 768, %s855, %s807, 256, 256, 16
        $region60: #{tpu_custom_call.1} parent=39 // pred_fallthru
          _
      $region40: #{tpu_custom_call.1} parent=5 // pred_fallthru
        _
      %p863 = scmp.le.s32.totalorder 2, %s24
      // Predicated region
      $region61: #{tpu_custom_call.1} parent=5 // pred_check
        %p864 = pneg %p863
      $region62: #{tpu_custom_call.1} parent=5 // pred_check_branch
        %866 = sbr.rel (%p864) target = $region64
      $region63: #{tpu_custom_call.1} parent=5 // pred_region
        %s867 = ssub.s32 %s24, 2
        // Predicated region
        $region65: #{tpu_custom_call.1} parent=63 // pred_check
          %p868 = pneg %p184
        $region66: #{tpu_custom_call.1} parent=63 // pred_check_branch
          %870 = sbr.rel (%p868) target = $region68
        $region67: #{tpu_custom_call.1} parent=63 // pred_region
          %s871 = sand.u32 %s169, 1
          %s872 = scalar_lea.sflag [#allocation4], %s871
          %s873 = sand.u32 %s169, 1
          %s874 = smul.addr %s873, 8
          %s875 = scalar_lea.vmem [#allocation7], %s874
          %876 = dma.done %s872, 128
        $region68: #{tpu_custom_call.1} parent=63 // pred_fallthru
          _
        // Predicated region
        $region69: #{tpu_custom_call.1} parent=63 // pred_check
          %p877 = pneg %p212
        $region70: #{tpu_custom_call.1} parent=63 // pred_check_branch
          %879 = sbr.rel (%p877) target = $region72
        $region71: #{tpu_custom_call.1} parent=63 // pred_region
          %s880 = sand.u32 %s30, 1
          %s881 = scalar_lea.sflag [#allocation9], %s880
          %s882 = sand.u32 %s197, 1
          %s883 = smul.addr %s882, 48
          %s884 = scalar_lea.vmem [#allocation8], %s883
          %885 = dma.done %s881, 768
        $region72: #{tpu_custom_call.1} parent=63 // pred_fallthru
          _
        // Predicated region
        $region73: #{tpu_custom_call.1} parent=63 // pred_check
          %p886 = pneg %p240
        $region74: #{tpu_custom_call.1} parent=63 // pred_check_branch
          %888 = sbr.rel (%p886) target = $region76
        $region75: #{tpu_custom_call.1} parent=63 // pred_region
          %s889 = sand.u32 %s30, 1
          %s890 = scalar_lea.sflag [#allocation9], %s889
          %s891 = sand.u32 %s225, 1
          %s892 = smul.addr %s891, 48
          %s893 = scalar_lea.vmem [#allocation10], %s892
          %894 = dma.done %s890, 768
        $region76: #{tpu_custom_call.1} parent=63 // pred_fallthru
          _
      $region64: #{tpu_custom_call.1} parent=5 // pred_fallthru
        _
    $region6: #{tpu_custom_call.1} parent=1 // loop_footer
      %s28 = sadd.s32 1, %s24
    $region7: #{tpu_custom_call.1} parent=1 // loop_footer_branch
      %23 = sbr.rel target = $region3
    $region8: #{tpu_custom_call.1} parent=1 // loop_exit
      _
    %895 = vsyncpa [#allocation3], 1
    %s896 = scalar_lea.sflag [#allocation3], 1
    %897 = vsyncpa %s896, 1
    %898 = vsyncpa [#allocation6], 1
    %899 = vsyncpa [#allocation4], 1
    %s900 = scalar_lea.sflag [#allocation4], 1
    %901 = vsyncpa %s900, 1
    %902 = vsyncpa [#allocation9], 1
    %s903 = scalar_lea.sflag [#allocation9], 1
    %904 = vsyncpa %s903, 1

</llo_original>
